<compile_context>
chip_gen: v7x
topology: tpu7x:2x2x1
jax: 0.10.0
libtpu: 0.0.40
codegen_flags: <defaults>
</compile_context>

<pallas_src>
import functools

import jax
import jax.numpy as jnp
import numpy as np
from jax.experimental import pallas as pl
from jax.experimental.pallas import tpu as pltpu


def _basic_block_kernel(x_ref, w1_ref, b1_ref, w2_ref, b2_ref, out_ref, col_ref,
                        *, B, H, WC):
    # x_ref  : (B*H, WC)   f32  lane-dense input rows (WC = W*C, lane axis)
    # w*_ref : (3*WC, WC)  bf16 banded conv weights (adapter + BN scale folded in)
    # b*_ref : (1, WC)     f32  BN shift tiled over W
    # out_ref: (B*H, WC)   f32
    # col_ref: (B*H, 3*WC) bf16 scratch: im2row matrix for the current stage
    zrow = jnp.zeros((1, WC), jnp.bfloat16)

    def fill_col(row_block):
        # row_block(b) -> (H, WC) bf16 rows of image b.  The three WC-wide bands
        # hold the h-1 / h / h+1 input rows; the H-halo (zero padding) is the
        # explicit zero row concatenated at the top / bottom of a band.  All
        # ref stores are aligned full (H, 3*WC) blocks; the one-row shifts
        # happen at the value level.
        for b in range(B):
            r = b * H
            xb = row_block(b)                                    # (H, WC) bf16
            up = jnp.concatenate([zrow, xb[:H - 1]], axis=0)     # rows h-1
            dn = jnp.concatenate([xb[1:], zrow], axis=0)         # rows h+1
            col_ref[r:r + H, :] = jnp.concatenate([up, xb, dn], axis=1)

    def conv_bn(w_ref, b_ref):
        # Single K = 3*WC matmul per stage; the W-halo is encoded as zero blocks
        # inside the banded weight, the H-halo as the zero rows written above.
        y = jnp.dot(col_ref[...], w_ref[...], preferred_element_type=jnp.float32)
        return y + b_ref[0, :]                                   # folded BN shift

    # ---- stage 1: conv3x3 + 1x1 adapter + BN1 -------------------------------
    fill_col(lambda b: x_ref[b * H:(b + 1) * H, :].astype(jnp.bfloat16))
    a1 = jnp.maximum(conv_bn(w1_ref, b1_ref), 0.0).astype(jnp.bfloat16)  # relu

    # ---- stage 2: a1 goes straight into the im2row scratch (not kept live
    # across the second matmul); residual x is re-read in the epilogue --------
    fill_col(lambda b: a1[b * H:(b + 1) * H, :])
    y2 = conv_bn(w2_ref, b2_ref) + x_ref[...]                    # shortcut == 0
    out_ref[...] = jnp.maximum(y2, 0.0).astype(out_ref.dtype)


def _fold_bn(gamma, beta, mean, var, eps=1e-5):
    scale = gamma / jnp.sqrt(var + eps)
    shift = beta - mean * scale
    return scale, shift


def _banded_weight(w3, w1, scale, W):
    """Fold the 1x1 adapter into the 3x3 center tap and the BN scale into the
    weights, then expand along W into a banded matrix (3*W*Cin, W*Cout) acting on
    row-concatenated (H, 3*W*Cin) image rows.  Out-of-range W taps are zero
    blocks (== zero padding along W)."""
    Cin, Cout = w3.shape[2], w3.shape[3]
    k = w3.at[1, 1].add(w1) * scale[None, None, None, :]      # (3,3,Cin,Cout) HWIO
    sel = np.zeros((3, W, W), np.float32)                     # sel[dw, w_in, w_out]
    for dw in range(3):
        for wo in range(W):
            wi = wo + dw - 1
            if 0 <= wi < W:
                sel[dw, wi, wo] = 1.0
    big = jnp.einsum("dio,hdce->hicoe", jnp.asarray(sel), k)  # (3, W, Cin, W, Cout)
    return big.reshape(3 * W * Cin, W * Cout)


def _pick_images_per_step(N, H, target_m=256):
    """Images per grid step: keep >= 2 grid steps when possible (both v7x TCs),
    and among those aim for M = B*H matmul rows close to `target_m`."""
    divisors = [d for d in range(1, N + 1) if N % d == 0]
    cands = [d for d in divisors if N // d >= 2] or divisors
    return min(cands, key=lambda d: abs(d * H - target_m))


def basic_block_forward_flat(x, params, *, W, images_per_step=None):
    """BasicBlock forward in the lane-dense layout the kernel wants the whole
    network to stay in: x is (N, H, W*C), returns (N, H, W*C)."""
    N, H, WC = x.shape
    assert WC % 128 == 0, "lane axis W*C must be a multiple of 128"
    assert H % 8 == 0, "H must be a multiple of 8 (sublane tile)"

    B = images_per_step or _pick_images_per_step(N, H)
    assert N % B == 0, "images_per_step must divide N"
    grid = (N // B,)

    s1, sh1 = _fold_bn(*params["bn1"])
    s2, sh2 = _fold_bn(*params["bn2"])
    # bf16 MXU operands; accumulation and the BN/ReLU/residual epilogue stay f32.
    w1 = _banded_weight(params["w3_1"], params["w1_1"], s1, W).astype(jnp.bfloat16)
    w2 = _banded_weight(params["w3_2"], params["w1_2"], s2, W).astype(jnp.bfloat16)
    b1 = jnp.tile(sh1, W).reshape(1, WC).astype(jnp.float32)
    b2 = jnp.tile(sh2, W).reshape(1, WC).astype(jnp.float32)

    # Free reshape: collapse (N, H) -> rows; the lane axis is untouched.
    x2d = x.reshape(N * H, WC)

    kernel = functools.partial(_basic_block_kernel, B=B, H=H, WC=WC)
    out = pl.pallas_call(
        kernel,
        out_shape=jax.ShapeDtypeStruct((N * H, WC), x.dtype),
        grid_spec=pltpu.PrefetchScalarGridSpec(
            num_scalar_prefetch=0,
            grid=grid,                      # B images per step, >= 2 steps when possible
            in_specs=[
                pl.BlockSpec((B * H, WC), lambda n: (n, 0)),
                pl.BlockSpec((3 * WC, WC), lambda n: (0, 0)),
                pl.BlockSpec((1, WC), lambda n: (0, 0)),
                pl.BlockSpec((3 * WC, WC), lambda n: (0, 0)),
                pl.BlockSpec((1, WC), lambda n: (0, 0)),
            ],
            out_specs=pl.BlockSpec((B * H, WC), lambda n: (n, 0)),
            scratch_shapes=[pltpu.VMEM((B * H, 3 * WC), jnp.bfloat16)],
        ),
        compiler_params=pltpu.CompilerParams(
            dimension_semantics=("parallel",)),
    )(x2d, w1, b1, w2, b2)
    # TODO(synk): if the surrounding network tolerates bf16 activations, emit the
    # output (and accept the input) in bf16 to halve activation HBM traffic.

    return out.reshape(N, H, WC)


def basic_block_forward(x_nchw, params):
    """NCHW convenience wrapper matching the PyTorch module's interface.
    In a real network keep activations lane-dense (N, H, W*C) across blocks and
    call basic_block_forward_flat directly: these two transposes are full
    read+write passes over the activation and should be hoisted once per
    network, not paid per BasicBlock."""
    N, C, H, W = x_nchw.shape
    x = jnp.transpose(x_nchw, (0, 2, 3, 1)).reshape(N, H, W * C)
    y = basic_block_forward_flat(x, params, W=W)
    return jnp.transpose(y.reshape(N, H, W, C), (0, 3, 1, 2))
    # TODO(synk): shortcut==1 path (AvgPool2d(2) + channel-doubling concat),
    # stride=2, training-mode BN and dropout2d are not exercised in this config.


def _ref_forward(x_nchw, params):
    """Pure-JAX f32 reference for correctness check."""
    def conv3(x, w):
        return jax.lax.conv_general_dilated(
            x, w, (1, 1), "SAME", dimension_numbers=("NHWC", "HWIO", "NHWC"))

    x = jnp.transpose(x_nchw, (0, 2, 3, 1))
    s1, sh1 = _fold_bn(*params["bn1"])
    s2, sh2 = _fold_bn(*params["bn2"])
    y = conv3(x, params["w3_1"]) + jnp.einsum("nhwc,cd->nhwd", x, params["w1_1"])
    y = y * s1 + sh1
    z = jnp.maximum(y, 0.0)
    y2 = conv3(z, params["w3_2"]) + jnp.einsum("nhwc,cd->nhwd", z, params["w1_2"])
    y2 = y2 * s2 + sh2 + x
    return jnp.transpose(jnp.maximum(y2, 0.0), (0, 3, 1, 2))


if __name__ == "__main__":
    key = jax.random.PRNGKey(0)
    # in_planes == planes, stride=1, shortcut=0;  W*C = 128 -> lane-dense layout.
    N, C, H, W = 2, 8, 16, 16
    ks = jax.random.split(key, 13)

    x = jax.random.normal(ks[0], (N, C, H, W), jnp.float32)
    params = {
        # conv weights stored HWIO (torch OIHW transposed)
        "w3_1": 0.1 * jax.random.normal(ks[1], (3, 3, C, C), jnp.float32),
        "w1_1": 0.1 * jax.random.normal(ks[2], (C, C), jnp.float32),
        "bn1": (1.0 + 0.1 * jax.random.normal(ks[3], (C,), jnp.float32),      # gamma
                0.1 * jax.random.normal(ks[4], (C,), jnp.float32),            # beta
                0.1 * jax.random.normal(ks[5], (C,), jnp.float32),            # running_mean
                0.5 + jnp.abs(jax.random.normal(ks[6], (C,), jnp.float32))),  # running_var
        "w3_2": 0.1 * jax.random.normal(ks[7], (3, 3, C, C), jnp.float32),
        "w1_2": 0.1 * jax.random.normal(ks[8], (C, C), jnp.float32),
        "bn2": (1.0 + 0.1 * jax.random.normal(ks[9], (C,), jnp.float32),
                0.1 * jax.random.normal(ks[10], (C,), jnp.float32),
                0.1 * jax.random.normal(ks[11], (C,), jnp.float32),
                0.5 + jnp.abs(jax.random.normal(ks[12], (C,), jnp.float32))),
    }

    out = basic_block_forward(x, params)
    out = jax.block_until_ready(out)
    assert out.shape == (N, C, H, W)

    ref = _ref_forward(x, params)
    # tolerance covers bf16 MXU operands (accumulation and epilogue are f32)
    np.testing.assert_allclose(np.asarray(out), np.asarray(ref),
                               rtol=5e-2, atol=5e-2)
    print("KERNEL_OK")
</pallas_src>

<mosaic_0001>
module attributes {stable_mosaic.version = 11 : i64} {
  func.func @_basic_block_kernel(%arg0: i32, %arg1: memref<16x128xf32, #tpu.memory_space<vmem>>, %arg2: memref<384x128xbf16, #tpu.memory_space<vmem>>, %arg3: memref<1x128xf32, #tpu.memory_space<vmem>>, %arg4: memref<384x128xbf16, #tpu.memory_space<vmem>>, %arg5: memref<1x128xf32, #tpu.memory_space<vmem>>, %arg6: memref<16x128xf32, #tpu.memory_space<vmem>>, %arg7: memref<16x384xbf16, #tpu.memory_space<vmem>>) attributes {dimension_semantics = [#tpu.dimension_semantics<parallel>], iteration_bounds = array<i64: 2>, scalar_prefetch = 0 : i64, scratch_operands = 1 : i64, tpu.core_type = #tpu.core_type<tc>, window_params = [{transform_indices = @transform_0, window_bounds = array<i64: 16, 128>}, {pipeline_mode = #tpu.pipeline_mode<synchronous>, transform_indices = @transform_1, window_bounds = array<i64: 384, 128>}, {pipeline_mode = #tpu.pipeline_mode<synchronous>, transform_indices = @transform_2, window_bounds = array<i64: 1, 128>}, {pipeline_mode = #tpu.pipeline_mode<synchronous>, transform_indices = @transform_3, window_bounds = array<i64: 384, 128>}, {pipeline_mode = #tpu.pipeline_mode<synchronous>, transform_indices = @transform_4, window_bounds = array<i64: 1, 128>}, {transform_indices = @transform_5, window_bounds = array<i64: 16, 128>}]} {
    %cst = arith.constant 0.000000e+00 : bf16
    %0 = vector.broadcast %cst : bf16 to vector<1x128xbf16>
    %c0 = arith.constant 0 : index
    %c0_0 = arith.constant 0 : index
    %1 = vector.load %arg1[%c0, %c0_0] : memref<16x128xf32, #tpu.memory_space<vmem>>, vector<16x128xf32>
    %2 = arith.truncf %1 : vector<16x128xf32> to vector<16x128xbf16>
    %3 = vector.extract_strided_slice %2 {offsets = [0, 0], sizes = [15, 128], strides = [1, 1]} : vector<16x128xbf16> to vector<15x128xbf16>
    %4 = tpu.concatenate %0, %3 in 0 : vector<1x128xbf16>, vector<15x128xbf16> -> vector<16x128xbf16>
    %5 = vector.extract_strided_slice %2 {offsets = [1, 0], sizes = [15, 128], strides = [1, 1]} : vector<16x128xbf16> to vector<15x128xbf16>
    %6 = tpu.concatenate %5, %0 in 0 : vector<15x128xbf16>, vector<1x128xbf16> -> vector<16x128xbf16>
    %7 = tpu.concatenate %4, %2, %6 in 1 : vector<16x128xbf16>, vector<16x128xbf16>, vector<16x128xbf16> -> vector<16x384xbf16>
    %c0_1 = arith.constant 0 : index
    %c0_2 = arith.constant 0 : index
    %8 = vector.load %arg7[%c0_1, %c0_2] : memref<16x384xbf16, #tpu.memory_space<vmem>>, vector<16x384xbf16>
    tpu.vector_store %arg7[%c0_1, %c0_2], %7 {strides = array<i32>} : memref<16x384xbf16, #tpu.memory_space<vmem>>, vector<16x384xbf16>,
    %c0_3 = arith.constant 0 : index
    %c0_4 = arith.constant 0 : index
    %9 = vector.load %arg7[%c0_3, %c0_4] : memref<16x384xbf16, #tpu.memory_space<vmem>>, vector<16x384xbf16>
    %c0_5 = arith.constant 0 : index
    %c0_6 = arith.constant 0 : index
    %10 = vector.load %arg2[%c0_5, %c0_6] : memref<384x128xbf16, #tpu.memory_space<vmem>>, vector<384x128xbf16>
    %cst_7 = arith.constant dense<0.000000e+00> : vector<16x128xf32>
    %11 = tpu.matmul %9, %10, %cst_7 {dimension_numbers = #tpu.dot_dimension_numbers<[1], [0], [0], [1], [0, 0, 1, 1], [], []>} : vector<16x384xbf16>, vector<384x128xbf16>, vector<16x128xf32> -> vector<16x128xf32>
    %c0_8 = arith.constant 0 : index
    %c0_9 = arith.constant 0 : index
    %12 = vector.load %arg3[%c0_8, %c0_9] : memref<1x128xf32, #tpu.memory_space<vmem>>, vector<1x128xf32>
    %13 = vector.shape_cast %12 : vector<1x128xf32> to vector<128xf32>
    %14 = vector.shape_cast %13 : vector<128xf32> to vector<1x128xf32>
    %15 = vector.broadcast %14 : vector<1x128xf32> to vector<16x128xf32>
    %16 = arith.addf %11, %15 : vector<16x128xf32>
    %cst_10 = arith.constant 0.000000e+00 : f32
    %17 = vector.broadcast %cst_10 : f32 to vector<16x128xf32>
    %18 = arith.maximumf %16, %17 : vector<16x128xf32>
    %19 = arith.truncf %18 : vector<16x128xf32> to vector<16x128xbf16>
    %20 = vector.extract_strided_slice %19 {offsets = [0, 0], sizes = [15, 128], strides = [1, 1]} : vector<16x128xbf16> to vector<15x128xbf16>
    %21 = tpu.concatenate %0, %20 in 0 : vector<1x128xbf16>, vector<15x128xbf16> -> vector<16x128xbf16>
    %22 = vector.extract_strided_slice %19 {offsets = [1, 0], sizes = [15, 128], strides = [1, 1]} : vector<16x128xbf16> to vector<15x128xbf16>
    %23 = tpu.concatenate %22, %0 in 0 : vector<15x128xbf16>, vector<1x128xbf16> -> vector<16x128xbf16>
    %24 = tpu.concatenate %21, %19, %23 in 1 : vector<16x128xbf16>, vector<16x128xbf16>, vector<16x128xbf16> -> vector<16x384xbf16>
    %c0_11 = arith.constant 0 : index
    %c0_12 = arith.constant 0 : index
    %25 = vector.load %arg7[%c0_11, %c0_12] : memref<16x384xbf16, #tpu.memory_space<vmem>>, vector<16x384xbf16>
    tpu.vector_store %arg7[%c0_11, %c0_12], %24 {strides = array<i32>} : memref<16x384xbf16, #tpu.memory_space<vmem>>, vector<16x384xbf16>,
    %c0_13 = arith.constant 0 : index
    %c0_14 = arith.constant 0 : index
    %26 = vector.load %arg7[%c0_13, %c0_14] : memref<16x384xbf16, #tpu.memory_space<vmem>>, vector<16x384xbf16>
    %c0_15 = arith.constant 0 : index
    %c0_16 = arith.constant 0 : index
    %27 = vector.load %arg4[%c0_15, %c0_16] : memref<384x128xbf16, #tpu.memory_space<vmem>>, vector<384x128xbf16>
    %cst_17 = arith.constant dense<0.000000e+00> : vector<16x128xf32>
    %28 = tpu.matmul %26, %27, %cst_17 {dimension_numbers = #tpu.dot_dimension_numbers<[1], [0], [0], [1], [0, 0, 1, 1], [], []>} : vector<16x384xbf16>, vector<384x128xbf16>, vector<16x128xf32> -> vector<16x128xf32>
    %c0_18 = arith.constant 0 : index
    %c0_19 = arith.constant 0 : index
    %29 = vector.load %arg5[%c0_18, %c0_19] : memref<1x128xf32, #tpu.memory_space<vmem>>, vector<1x128xf32>
    %30 = vector.shape_cast %29 : vector<1x128xf32> to vector<128xf32>
    %31 = vector.shape_cast %30 : vector<128xf32> to vector<1x128xf32>
    %32 = vector.broadcast %31 : vector<1x128xf32> to vector<16x128xf32>
    %33 = arith.addf %28, %32 : vector<16x128xf32>
    %c0_20 = arith.constant 0 : index
    %c0_21 = arith.constant 0 : index
    %34 = vector.load %arg1[%c0_20, %c0_21] : memref<16x128xf32, #tpu.memory_space<vmem>>, vector<16x128xf32>
    %35 = arith.addf %33, %34 : vector<16x128xf32>
    %cst_22 = arith.constant 0.000000e+00 : f32
    %36 = vector.broadcast %cst_22 : f32 to vector<16x128xf32>
    %37 = arith.maximumf %35, %36 : vector<16x128xf32>
    %c0_23 = arith.constant 0 : index
    %c0_24 = arith.constant 0 : index
    %38 = vector.load %arg6[%c0_23, %c0_24] : memref<16x128xf32, #tpu.memory_space<vmem>>, vector<16x128xf32>
    tpu.vector_store %arg6[%c0_23, %c0_24], %37 {strides = array<i32>} : memref<16x128xf32, #tpu.memory_space<vmem>>, vector<16x128xf32>,
    return
  }
  func.func @transform_0(%arg0: i32) -> (i32, i32) {
    %c0_i32 = arith.constant 0 : i32
    %c0_i32_0 = arith.constant 0 : i32
    return %arg0, %c0_i32 : i32, i32
  }
  func.func @transform_1(%arg0: i32) -> (i32, i32) {
    %c0_i32 = arith.constant 0 : i32
    %c0_i32_0 = arith.constant 0 : i32
    %c0_i32_1 = arith.constant 0 : i32
    return %c0_i32, %c0_i32_0 : i32, i32
  }
  func.func @transform_2(%arg0: i32) -> (i32, i32) {
    %c0_i32 = arith.constant 0 : i32
    %c0_i32_0 = arith.constant 0 : i32
    %c0_i32_1 = arith.constant 0 : i32
    return %c0_i32, %c0_i32_0 : i32, i32
  }
  func.func @transform_3(%arg0: i32) -> (i32, i32) {
    %c0_i32 = arith.constant 0 : i32
    %c0_i32_0 = arith.constant 0 : i32
    %c0_i32_1 = arith.constant 0 : i32
    return %c0_i32, %c0_i32_0 : i32, i32
  }
  func.func @transform_4(%arg0: i32) -> (i32, i32) {
    %c0_i32 = arith.constant 0 : i32
    %c0_i32_0 = arith.constant 0 : i32
    %c0_i32_1 = arith.constant 0 : i32
    return %c0_i32, %c0_i32_0 : i32, i32
  }
  func.func @transform_5(%arg0: i32) -> (i32, i32) {
    %c0_i32 = arith.constant 0 : i32
    %c0_i32_0 = arith.constant 0 : i32
    return %arg0, %c0_i32 : i32, i32
  }
}

</mosaic_0001>

<llo_original>
// kernel: tpu_custom_call.1
$region0: #{tpu_custom_call.1}
  #allocation0 [shape = 'u32[]', space=smem, size = 0x4, offset = 0x4, fixed_abs, tag = 'smem constant byte address 0x4 - core index']
  #allocation1 [shape = 'u32[144,128]{1,0:T(1,128)}', space=vmem, size = 0x12000, scoped, tag = 'internal scratch']
  #allocation2 [shape = 'bf16[16,384]{1,0:T(16,128)(2,1)}', space=vmem, size = 0x3000, scoped, tag = 'scratch operand']
  %s0 = inlined_call_operand.hbm [shape: f32[32,128], index: 0, kind: input, shape index: {}]
  %s1 = inlined_call_operand.hbm [shape: bf16[384,128], index: 1, kind: input, shape index: {}]
  %s2 = inlined_call_operand.vmem [shape: f32[1,128], index: 2, kind: input, shape index: {}]
  %s3 = inlined_call_operand.hbm [shape: bf16[384,128], index: 3, kind: input, shape index: {}]
  %s4 = inlined_call_operand.vmem [shape: f32[1,128], index: 4, kind: input, shape index: {}]
  %s5 = inlined_call_operand.hbm [shape: f32[32,128], index: 5, kind: output, shape index: {}]
  %s6 = sld [smem:[#allocation0]]
  $region65: #{tpu_custom_call.1} parent=0
    _
  %s8 = ssub.s32 1, %s6
  %s9 = scalar_select 0, %s8, %s6
  $region1: #{tpu_custom_call.1} parent=0
    #allocation3 [shape = 'u8[16384]{0}', space=vmem, size = 0x4000, scoped, tag = 'input window, operand 0']
    #allocation4 [shape = 's32[2]{0}', space=sflag, size = 0x8, scoped, tag = 'scoped memory for tpu_custom_call.1']
    #allocation5 [shape = 's32[2]{0}', space=sflag, size = 0x8, scoped, tag = 'scoped memory for tpu_custom_call.1']
    #allocation6 [shape = 'u8[98304]{0}', space=vmem, size = 0x18000, scoped, tag = 'input window, operand 1, single buffered']
    #allocation7 [shape = 's32[1]{0}', space=sflag, size = 0x4, scoped, tag = 'scoped memory for tpu_custom_call.1']
    #allocation8 [shape = 'u8[98304]{0}', space=vmem, size = 0x18000, scoped, tag = 'input window, operand 3, single buffered']
    #allocation9 [shape = 'u8[16384]{0}', space=vmem, size = 0x4000, scoped, tag = 'output window, operand 0']
    %10 = vsyncpa [#allocation4], 0
    %s11 = scalar_lea.sflag [#allocation4], 1
    %12 = vsyncpa %s11, 0
    %13 = vsyncpa [#allocation7], 0
    %14 = vsyncpa [#allocation5], 0
    %s15 = scalar_lea.sflag [#allocation5], 1
    %16 = vsyncpa %s15, 0
    loop: start=0, step=1, limit=4
    $region2: #{tpu_custom_call.1} parent=1 // loop_pre_header
      _
    $region3: #{tpu_custom_call.1} parent=1 // loop_header
      %s18 = sphi 0, %s22
      %p19 = scmp.ge.s32.totalorder %s18, 4
      %s28 = sphi 0, %s30
      %s31 = sphi 0, %s28
      %s32 = sphi 0, %s31
      %s48 = sphi 0, %s32
      %s52 = sphi 0, %s52
      %s54 = sphi 0, %s52
      %s55 = sphi 0, %s54
      %s69 = sphi 0, %s55
      %s73 = sphi 0, %s73
      %s75 = sphi 0, %s73
      %s76 = sphi 0, %s75
      %s90 = sphi 0, %s76
      %s94 = sphi 0, %s94
      %s96 = sphi 0, %s94
      %s97 = sphi 0, %s96
      %s111 = sphi 0, %s97
      %s115 = sphi 0, %s115
      %s117 = sphi 0, %s115
      %s118 = sphi 0, %s117
      %s132 = sphi 0, %s118
      %s138 = sphi 0, %s140
      %s141 = sphi 0, %s138
      %s142 = sphi 0, %s141
      %s158 = sphi 0, %s142
    $region4: #{tpu_custom_call.1} parent=1 // loop_header_branch
      %21 = sbr.rel (%p19) target = $region8
    $region5: #{tpu_custom_call.1} parent=1 // loop_body
      %s23 = ssub.s32 %s18, 1
      %s24 = ssub.s32 %s18, 2
      %s25 = sadd.s32 %s18, 1
      %s26 = ssub.s32 %s18, %s25
      %p27 = scmp.eq.s32.totalorder %s26, 0
      %s29 = sadd.s32 %s28, 1
      %s30 = scalar_select %p27, %s28, %s29
      %p33 = pneg %p27
      %p34 = scmp.eq.s32.totalorder %s18, 1
      %p35 = por %p33, %p34
      %p36 = scmp.ne.s32.totalorder %s28, %s31
      %p37 = scmp.eq.s32.totalorder %s18, 0
      %p38 = por %p36, %p37
      %p39 = scmp.ne.s32.totalorder %s28, %s31
      %p40 = scmp.eq.s32.totalorder %s23, 1
      %p41 = por %p39, %p40
      %p42 = scmp.ne.s32.totalorder %s31, %s32
      %p43 = scmp.eq.s32.totalorder %s23, 0
      %p44 = por %p42, %p43
      %p45 = scmp.ne.s32.totalorder %s31, %s32
      %p46 = scmp.eq.s32.totalorder %s24, 1
      %p47 = por %p45, %p46
      %p49 = scmp.ne.s32.totalorder %s32, %s48
      %p50 = scmp.eq.s32.totalorder %s24, 0
      %p51 = por %p49, %p50
      %s53 = sadd.s32 %s52, 1
      %p56 = scmp.eq.s32.totalorder %s18, 1
      %p57 = scmp.ne.s32.totalorder %s52, %s54
      %p58 = scmp.eq.s32.totalorder %s18, 0
      %p59 = por %p57, %p58
      %p60 = scmp.ne.s32.totalorder %s52, %s54
      %p61 = scmp.eq.s32.totalorder %s23, 1
      %p62 = por %p60, %p61
      %p63 = scmp.ne.s32.totalorder %s54, %s55
      %p64 = scmp.eq.s32.totalorder %s23, 0
      %p65 = por %p63, %p64
      %p66 = scmp.ne.s32.totalorder %s54, %s55
      %p67 = scmp.eq.s32.totalorder %s24, 1
      %p68 = por %p66, %p67
      %p70 = scmp.ne.s32.totalorder %s55, %s69
      %p71 = scmp.eq.s32.totalorder %s24, 0
      %p72 = por %p70, %p71
      %s74 = sadd.s32 %s73, 1
      %p77 = scmp.eq.s32.totalorder %s18, 1
      %p78 = scmp.ne.s32.totalorder %s73, %s75
      %p79 = scmp.eq.s32.totalorder %s18, 0
      %p80 = por %p78, %p79
      %p81 = scmp.ne.s32.totalorder %s73, %s75
      %p82 = scmp.eq.s32.totalorder %s23, 1
      %p83 = por %p81, %p82
      %p84 = scmp.ne.s32.totalorder %s75, %s76
      %p85 = scmp.eq.s32.totalorder %s23, 0
      %p86 = por %p84, %p85
      %p87 = scmp.ne.s32.totalorder %s75, %s76
      %p88 = scmp.eq.s32.totalorder %s24, 1
      %p89 = por %p87, %p88
      %p91 = scmp.ne.s32.totalorder %s76, %s90
      %p92 = scmp.eq.s32.totalorder %s24, 0
      %p93 = por %p91, %p92
      %s95 = sadd.s32 %s94, 1
      %p98 = scmp.eq.s32.totalorder %s18, 1
      %p99 = scmp.ne.s32.totalorder %s94, %s96
      %p100 = scmp.eq.s32.totalorder %s18, 0
      %p101 = por %p99, %p100
      %p102 = scmp.ne.s32.totalorder %s94, %s96
      %p103 = scmp.eq.s32.totalorder %s23, 1
      %p104 = por %p102, %p103
      %p105 = scmp.ne.s32.totalorder %s96, %s97
      %p106 = scmp.eq.s32.totalorder %s23, 0
      %p107 = por %p105, %p106
      %p108 = scmp.ne.s32.totalorder %s96, %s97
      %p109 = scmp.eq.s32.totalorder %s24, 1
      %p110 = por %p108, %p109
      %p112 = scmp.ne.s32.totalorder %s97, %s111
      %p113 = scmp.eq.s32.totalorder %s24, 0
      %p114 = por %p112, %p113
      %s116 = sadd.s32 %s115, 1
      %p119 = scmp.eq.s32.totalorder %s18, 1
      %p120 = scmp.ne.s32.totalorder %s115, %s117
      %p121 = scmp.eq.s32.totalorder %s18, 0
      %p122 = por %p120, %p121
      %p123 = scmp.ne.s32.totalorder %s115, %s117
      %p124 = scmp.eq.s32.totalorder %s23, 1
      %p125 = por %p123, %p124
      %p126 = scmp.ne.s32.totalorder %s117, %s118
      %p127 = scmp.eq.s32.totalorder %s23, 0
      %p128 = por %p126, %p127
      %p129 = scmp.ne.s32.totalorder %s117, %s118
      %p130 = scmp.eq.s32.totalorder %s24, 1
      %p131 = por %p129, %p130
      %p133 = scmp.ne.s32.totalorder %s118, %s132
      %p134 = scmp.eq.s32.totalorder %s24, 0
      %p135 = por %p133, %p134
      %s136 = ssub.s32 %s18, %s25
      %p137 = scmp.eq.s32.totalorder %s136, 0
      %s139 = sadd.s32 %s138, 1
      %s140 = scalar_select %p137, %s138, %s139
      %p143 = pneg %p137
      %p144 = scmp.eq.s32.totalorder %s18, 1
      %p145 = por %p143, %p144
      %p146 = scmp.ne.s32.totalorder %s138, %s141
      %p147 = scmp.eq.s32.totalorder %s18, 0
      %p148 = por %p146, %p147
      %p149 = scmp.ne.s32.totalorder %s138, %s141
      %p150 = scmp.eq.s32.totalorder %s23, 1
      %p151 = por %p149, %p150
      %p152 = scmp.ne.s32.totalorder %s141, %s142
      %p153 = scmp.eq.s32.totalorder %s23, 0
      %p154 = por %p152, %p153
      %p155 = scmp.ne.s32.totalorder %s141, %s142
      %p156 = scmp.eq.s32.totalorder %s24, 1
      %p157 = por %p155, %p156
      %p159 = scmp.ne.s32.totalorder %s142, %s158
      %p160 = scmp.eq.s32.totalorder %s24, 0
      %p161 = por %p159, %p160
      %p162 = scmp.le.s32.totalorder 1, %s18
      %p163 = scmp.lt.s32.totalorder %s18, 3
      %p164 = pnand %p162, %p163
      %p165 = pneg %p164
      // Predicated region
      $region9: #{tpu_custom_call.1} parent=5 // pred_check
        _
      $region10: #{tpu_custom_call.1} parent=5 // pred_check_branch
        %167 = sbr.rel (%p164) target = $region12
      $region11: #{tpu_custom_call.1} parent=5 // pred_region
        %s168 = ssub.s32 %s18, 1
        // Predicated region
        $region13: #{tpu_custom_call.1} parent=11 // pred_check
          %p169 = pneg %p65
        $region14: #{tpu_custom_call.1} parent=11 // pred_check_branch
          %171 = sbr.rel (%p169) target = $region16
        $region15: #{tpu_custom_call.1} parent=11 // pred_region
          %s173 = ssub.s32 3072, 3072
          %174 = vsyncadd [#allocation7], %s173
          %s175 = sshll.u32 [#allocation6], 4
          %s176 = int_to_ptr.vmem [resolvable:$true] %s175
          %181 = dma.hbm_to_vmem [thread:$0]  %s1, 3072, %s176, [#allocation7], 64, 64, 4
        $region16: #{tpu_custom_call.1} parent=11 // pred_fallthru
          _
        // Predicated region
        $region17: #{tpu_custom_call.1} parent=11 // pred_check
          %p182 = pneg %p86
        $region18: #{tpu_custom_call.1} parent=11 // pred_check_branch
          %184 = sbr.rel (%p182) target = $region20
        $region19: #{tpu_custom_call.1} parent=11 // pred_region
          _
        $region20: #{tpu_custom_call.1} parent=11 // pred_fallthru
          _
        // Predicated region
        $region21: #{tpu_custom_call.1} parent=11 // pred_check
          %p185 = pneg %p107
        $region22: #{tpu_custom_call.1} parent=11 // pred_check_branch
          %187 = sbr.rel (%p185) target = $region24
        $region23: #{tpu_custom_call.1} parent=11 // pred_region
          %s189 = ssub.s32 3072, 3072
          %190 = vsyncadd [#allocation7], %s189
          %s191 = sshll.u32 [#allocation8], 4
          %s192 = int_to_ptr.vmem [resolvable:$true] %s191
          %197 = dma.hbm_to_vmem [thread:$0]  %s3, 3072, %s192, [#allocation7], 64, 64, 4
        $region24: #{tpu_custom_call.1} parent=11 // pred_fallthru
          _
        // Predicated region
        $region25: #{tpu_custom_call.1} parent=11 // pred_check
          %p198 = pneg %p128
        $region26: #{tpu_custom_call.1} parent=11 // pred_check_branch
          %200 = sbr.rel (%p198) target = $region28
        $region27: #{tpu_custom_call.1} parent=11 // pred_region
          _
        $region28: #{tpu_custom_call.1} parent=11 // pred_fallthru
          _
      $region12: #{tpu_custom_call.1} parent=5 // pred_fallthru
        _
      %p201 = scmp.lt.s32.totalorder %s18, 2
      // Predicated region
      $region29: #{tpu_custom_call.1} parent=5 // pred_check
        %p202 = pneg %p201
      $region30: #{tpu_custom_call.1} parent=5 // pred_check_branch
        %204 = sbr.rel (%p202) target = $region32
      $region31: #{tpu_custom_call.1} parent=5 // pred_region
        // Predicated region
        $region33: #{tpu_custom_call.1} parent=31 // pred_check
          %p205 = pneg %p38
        $region34: #{tpu_custom_call.1} parent=31 // pred_check_branch
          %207 = sbr.rel (%p205) target = $region36
        $region35: #{tpu_custom_call.1} parent=31 // pred_region
          %s208 = sand.u32 %s28, 1
          %s209 = scalar_lea.sflag [#allocation4], %s208
          %s210 = sand.u32 %s28, 1
          %s211 = smul.addr %s210, 16
          %s212 = scalar_lea.vmem [#allocation3], %s211
          %s213 = smul.u32 2, %s18
          %s215 = ssub.s32 256, 256
          %216 = vsyncadd %s209, %s215
          %s217 = smul.addr %s213, 128
          %s218 = scalar_lea.hbm %s0, %s217
          %s219 = sshll.u32 %s212, 4
          %s220 = int_to_ptr.vmem [resolvable:$true] %s219
          %225 = dma.hbm_to_vmem [thread:$0]  %s218, 256, %s220, %s209, 128, 128, 8
        $region36: #{tpu_custom_call.1} parent=31 // pred_fallthru
          _
      $region32: #{tpu_custom_call.1} parent=5 // pred_fallthru
        _
      %p226 = scmp.le.s32.totalorder 1, %s18
      %p227 = scmp.lt.s32.totalorder %s18, 3
      %p228 = pnand %p226, %p227
      %p229 = pneg %p228
      // Predicated region
      $region37: #{tpu_custom_call.1} parent=5 // pred_check
        _
      $region38: #{tpu_custom_call.1} parent=5 // pred_check_branch
        %231 = sbr.rel (%p228) target = $region40
      $region39: #{tpu_custom_call.1} parent=5 // pred_region
        %s232 = ssub.s32 %s18, 1
        %s233 = sand.u32 %s31, 1
        %s234 = scalar_lea.sflag [#allocation4], %s233
        %s235 = sand.u32 %s31, 1
        %s236 = smul.addr %s235, 16
        %s237 = scalar_lea.vmem [#allocation3], %s236
        // Predicated region
        $region41: #{tpu_custom_call.1} parent=39 // pred_check
          %p238 = pneg %p44
        $region42: #{tpu_custom_call.1} parent=39 // pred_check_branch
          %240 = sbr.rel (%p238) target = $region44
        $region43: #{tpu_custom_call.1} parent=39 // pred_region
          %241 = dma.done %s234, 256
        $region44: #{tpu_custom_call.1} parent=39 // pred_fallthru
          _
        // Predicated region
        $region45: #{tpu_custom_call.1} parent=39 // pred_check
          %p242 = pneg %p65
        $region46: #{tpu_custom_call.1} parent=39 // pred_check_branch
          %244 = sbr.rel (%p242) target = $region48
        $region47: #{tpu_custom_call.1} parent=39 // pred_region
          %245 = dma.done [#allocation7], 3072
        $region48: #{tpu_custom_call.1} parent=39 // pred_fallthru
          _
        // Predicated region
        $region49: #{tpu_custom_call.1} parent=39 // pred_check
          %p246 = pneg %p107
        $region50: #{tpu_custom_call.1} parent=39 // pred_check_branch
          %248 = sbr.rel (%p246) target = $region52
        $region51: #{tpu_custom_call.1} parent=39 // pred_region
          %249 = dma.done [#allocation7], 3072
        $region52: #{tpu_custom_call.1} parent=39 // pred_fallthru
          _
        %s250 = sand.u32 %s31, 1
        %s251 = scalar_lea.sflag [#allocation4], %s250
        %s252 = sand.u32 %s31, 1
        %s253 = smul.addr %s252, 16
        %s254 = scalar_lea.vmem [#allocation3], %s253
        %p255 = pneg %p44
        %p256 = pneg %p41
        %p257 = pneg %p65
        %p258 = pneg %p62
        %p259 = pneg %p86
        %p260 = pneg %p83
        %p261 = pneg %p107
        %p262 = pneg %p104
        %p263 = pneg %p128
        %p264 = pneg %p125
        %p265 = pneg %p154
        %p266 = pneg %p151
        %s267 = sand.u32 %s141, 1
        %s268 = scalar_lea.sflag [#allocation5], %s267
        %s269 = sand.u32 %s141, 1
        %s270 = smul.addr %s269, 16
        %s271 = scalar_lea.vmem [#allocation9], %s270
        %s272 = smul.u32 2, %s23
        %s273 = smul.u32 2, %s23
        %v275 = vld [vmem:[%s237] sm:$0xff]
        %v276 = vld [vmem:[%s237 + $0x8] sm:$0xff]
        %v277 = vpack.c.bf16 %v276, %v275
        %v279 = vshrl.u32 %v277, 16
        %v281 = vrot.slane %v279, 7
        %v282 = vshll.u32 %v277, 16
        %v284 = vor.u32 %v281, %v282
        %vm286 = vcmask 1040384
        %vm287 = vsmask.f32 256
        %vm288 = vmand %vm286, %vm287
        %v289 = vsel %vm288, 0, %v284
        %v290 = vrot.slane %v282, 1
        %v291 = vor.u32 %v279, %v290
        %vm293 = vcmask 1047552
        %vm294 = vsmask.f32 7424
        %vm295 = vmand %vm293, %vm294
        %v296 = vsel %vm295, %v291, 0
        %297 = vst [vmem:[#allocation2] sm:$0xff] %v289
        %298 = vst [vmem:[#allocation2 + $0x8] sm:$0xff] %v277
        %299 = vst [vmem:[#allocation2 + $0x10] sm:$0xff] %v296
        %v300 = vld [vmem:[#allocation2] sm:$0xff]
        %v301 = vld [vmem:[#allocation2 + $0x8] sm:$0xff]
        %v302 = vld [vmem:[#allocation2 + $0x10] sm:$0xff]
        %v303 = vld [vmem:[#allocation6] sm:$0xf]
        %v304 = vld [vmem:[#allocation6 + $0x4] sm:$0xf]
        %v305 = vld [vmem:[#allocation6 + $0x8] sm:$0xf]
        %v306 = vld [vmem:[#allocation6 + $0xc] sm:$0xf]
        %v307 = vld [vmem:[#allocation6 + $0x10] sm:$0xf]
        %v308 = vld [vmem:[#allocation6 + $0x14] sm:$0xf]
        %v309 = vld [vmem:[#allocation6 + $0x18] sm:$0xf]
        %v310 = vld [vmem:[#allocation6 + $0x1c] sm:$0xf]
        %v311 = vld [vmem:[#allocation6 + $0x20] sm:$0xf]
        %v312 = vld [vmem:[#allocation6 + $0x24] sm:$0xf]
        %v313 = vld [vmem:[#allocation6 + $0x28] sm:$0xf]
        %v314 = vld [vmem:[#allocation6 + $0x2c] sm:$0xf]
        %v315 = vld [vmem:[#allocation6 + $0x30] sm:$0xf]
        %v316 = vld [vmem:[#allocation6 + $0x34] sm:$0xf]
        %v317 = vld [vmem:[#allocation6 + $0x38] sm:$0xf]
        %v318 = vld [vmem:[#allocation6 + $0x3c] sm:$0xf]
        %v319 = vld [vmem:[#allocation6 + $0x40] sm:$0xf]
        %v320 = vld [vmem:[#allocation6 + $0x44] sm:$0xf]
        %v321 = vld [vmem:[#allocation6 + $0x48] sm:$0xf]
        %v322 = vld [vmem:[#allocation6 + $0x4c] sm:$0xf]
        %v323 = vld [vmem:[#allocation6 + $0x50] sm:$0xf]
        %v324 = vld [vmem:[#allocation6 + $0x54] sm:$0xf]
        %v325 = vld [vmem:[#allocation6 + $0x58] sm:$0xf]
        %v326 = vld [vmem:[#allocation6 + $0x5c] sm:$0xf]
        %v327 = vld [vmem:[#allocation6 + $0x60] sm:$0xf]
        %v328 = vld [vmem:[#allocation6 + $0x64] sm:$0xf]
        %v329 = vld [vmem:[#allocation6 + $0x68] sm:$0xf]
        %v330 = vld [vmem:[#allocation6 + $0x6c] sm:$0xf]
        %v331 = vld [vmem:[#allocation6 + $0x70] sm:$0xf]
        %v332 = vld [vmem:[#allocation6 + $0x74] sm:$0xf]
        %v333 = vld [vmem:[#allocation6 + $0x78] sm:$0xf]
        %v334 = vld [vmem:[#allocation6 + $0x7c] sm:$0xf]
        %v335 = vld [vmem:[#allocation6 + $0x80] sm:$0xf]
        %v336 = vld [vmem:[#allocation6 + $0x84] sm:$0xf]
        %v337 = vld [vmem:[#allocation6 + $0x88] sm:$0xf]
        %v338 = vld [vmem:[#allocation6 + $0x8c] sm:$0xf]
        %v339 = vld [vmem:[#allocation6 + $0x90] sm:$0xf]
        %v340 = vld [vmem:[#allocation6 + $0x94] sm:$0xf]
        %v341 = vld [vmem:[#allocation6 + $0x98] sm:$0xf]
        %v342 = vld [vmem:[#allocation6 + $0x9c] sm:$0xf]
        %v343 = vld [vmem:[#allocation6 + $0xa0] sm:$0xf]
        %v344 = vld [vmem:[#allocation6 + $0xa4] sm:$0xf]
        %v345 = vld [vmem:[#allocation6 + $0xa8] sm:$0xf]
        %v346 = vld [vmem:[#allocation6 + $0xac] sm:$0xf]
        %v347 = vld [vmem:[#allocation6 + $0xb0] sm:$0xf]
        %v348 = vld [vmem:[#allocation6 + $0xb4] sm:$0xf]
        %v349 = vld [vmem:[#allocation6 + $0xb8] sm:$0xf]
        %v350 = vld [vmem:[#allocation6 + $0xbc] sm:$0xf]
        %v351 = vld [vmem:[%s2] sm:$0x1]
        %v353 = vlaneseq
        %v354 = vshrl.u32 %v353, 7
        %v355 = vsub.s32 0, %v354
        %v356 = vrot.slane %v351, %v355
        %v406 = vunpack.c.l.b16 %v303
        %v407 = vunpack.c.l.b16 %v304
        %v408 = vunpack.c.l.b16 %v305
        %v409 = vunpack.c.l.b16 %v306
        %v410 = vunpack.c.l.b16 %v307
        %v411 = vunpack.c.l.b16 %v308
        %v412 = vunpack.c.l.b16 %v309
        %v413 = vunpack.c.l.b16 %v310
        %v414 = vunpack.c.l.b16 %v311
        %v415 = vunpack.c.l.b16 %v312
        %v416 = vunpack.c.l.b16 %v313
        %v417 = vunpack.c.l.b16 %v314
        %v418 = vunpack.c.l.b16 %v315
        %v419 = vunpack.c.l.b16 %v316
        %v420 = vunpack.c.l.b16 %v317
        %v421 = vunpack.c.l.b16 %v318
        %v422 = vunpack.c.l.b16 %v319
        %v423 = vunpack.c.l.b16 %v320
        %v424 = vunpack.c.l.b16 %v321
        %v425 = vunpack.c.l.b16 %v322
        %v426 = vunpack.c.l.b16 %v323
        %v427 = vunpack.c.l.b16 %v324
        %v428 = vunpack.c.l.b16 %v325
        %v429 = vunpack.c.l.b16 %v326
        %v430 = vunpack.c.l.b16 %v327
        %v431 = vunpack.c.l.b16 %v328
        %v432 = vunpack.c.l.b16 %v329
        %v433 = vunpack.c.l.b16 %v330
        %v434 = vunpack.c.l.b16 %v331
        %v435 = vunpack.c.l.b16 %v332
        %v436 = vunpack.c.l.b16 %v333
        %v437 = vunpack.c.l.b16 %v334
        %v438 = vunpack.c.l.b16 %v335
        %v439 = vunpack.c.l.b16 %v336
        %v440 = vunpack.c.l.b16 %v337
        %v441 = vunpack.c.l.b16 %v338
        %v442 = vunpack.c.l.b16 %v339
        %v443 = vunpack.c.l.b16 %v340
        %v444 = vunpack.c.l.b16 %v341
        %v445 = vunpack.c.l.b16 %v342
        %v446 = vunpack.c.l.b16 %v343
        %v447 = vunpack.c.l.b16 %v344
        %v448 = vunpack.c.l.b16 %v345
        %v449 = vunpack.c.l.b16 %v346
        %v450 = vunpack.c.l.b16 %v347
        %v451 = vunpack.c.l.b16 %v348
        %v452 = vunpack.c.l.b16 %v349
        %v453 = vunpack.c.l.b16 %v350
        %v454 = vpack.c.b16 %v407, %v406
        %v455 = vpack.c.b16 %v409, %v408
        %v456 = vpack.c.b16 %v411, %v410
        %v457 = vpack.c.b16 %v413, %v412
        %v458 = vpack.c.b16 %v415, %v414
        %v459 = vpack.c.b16 %v417, %v416
        %v460 = vpack.c.b16 %v419, %v418
        %v461 = vpack.c.b16 %v421, %v420
        %v462 = vpack.c.b16 %v423, %v422
        %v463 = vpack.c.b16 %v425, %v424
        %v464 = vpack.c.b16 %v427, %v426
        %v465 = vpack.c.b16 %v429, %v428
        %v466 = vpack.c.b16 %v431, %v430
        %v467 = vpack.c.b16 %v433, %v432
        %v468 = vpack.c.b16 %v435, %v434
        %v469 = vpack.c.b16 %v437, %v436
        %v470 = vpack.c.b16 %v439, %v438
        %v471 = vpack.c.b16 %v441, %v440
        %v472 = vpack.c.b16 %v443, %v442
        %v473 = vpack.c.b16 %v445, %v444
        %v474 = vpack.c.b16 %v447, %v446
        %v475 = vpack.c.b16 %v449, %v448
        %v476 = vpack.c.b16 %v451, %v450
        %v477 = vpack.c.b16 %v453, %v452
        %502 = vmatprep.subr.bf16.mxu0 0
        %503 = vmatpush1.bf16.msra.mxu0 %v454
        %504 = vmatprep.subr.bf16.mxu0 0
        %505 = vmatpush1.bf16.msra.mxu0 %v455
        %506 = vmatprep.subr.bf16.mxu0 0
        %507 = vmatpush1.bf16.msra.mxu0 %v456
        %508 = vmatprep.subr.bf16.mxu0 0
        %509 = vmatpush1.bf16.msra.mxu0 %v457
        %510 = vmatprep.subr.bf16.mxu0 0
        %511 = vmatpush1.bf16.msra.mxu0 %v458
        %512 = vmatprep.subr.bf16.mxu0 0
        %513 = vmatpush1.bf16.msra.mxu0 %v459
        %514 = vmatprep.subr.bf16.mxu0 0
        %515 = vmatpush1.bf16.msra.mxu0 %v460
        %516 = vmatprep.subr.bf16.mxu0 0
        %517 = vmatpush1.bf16.msra.mxu0 %v461
        %518 = vmatprep.subr.bf16.mxu0 0
        %519 = vmatpush1.bf16.msra.mxu0 %v462
        %520 = vmatprep.subr.bf16.mxu0 0
        %521 = vmatpush1.bf16.msra.mxu0 %v463
        %522 = vmatprep.subr.bf16.mxu0 0
        %523 = vmatpush1.bf16.msra.mxu0 %v464
        %524 = vmatprep.subr.bf16.mxu0 0
        %525 = vmatpush1.bf16.msra.mxu0 %v465
        %526 = vmatprep.subr.bf16.mxu0 0
        %527 = vmatpush1.bf16.msra.mxu0 %v466
        %528 = vmatprep.subr.bf16.mxu0 0
        %529 = vmatpush1.bf16.msra.mxu0 %v467
        %530 = vmatprep.subr.bf16.mxu0 0
        %531 = vmatpush1.bf16.msra.mxu0 %v468
        %532 = vmatprep.subr.bf16.mxu0 0
        %533 = vmatpush1.bf16.msra.mxu0 %v469
        %534 = vmatprep.mubr.bf16.mxu0 %v301
        %535 = vmatmul.mubr.bf16.gmra.mrb[0].mxu0 %v300
        %v536 = vpop.f32.mrb[0].mxu0
        %v537 = vadd.f32 %v356, %v536
        %v538 = vpop.f32.mrb[0].mxu0
        %v539 = vpop.f32.mrb[0].mxu0
        %v540 = vadd.f32 %v356, %v539
        %v541 = vpop.f32.mrb[0].mxu0
        %542 = vdwg.mxu0
        %543 = vmatprep.subr.bf16.mxu0 0
        %544 = vmatpush1.bf16.msra.mxu0 %v470
        %545 = vmatprep.subr.bf16.mxu0 0
        %546 = vmatpush1.bf16.msra.mxu0 %v471
        %547 = vmatprep.subr.bf16.mxu0 0
        %548 = vmatpush1.bf16.msra.mxu0 %v472
        %549 = vmatprep.subr.bf16.mxu0 0
        %550 = vmatpush1.bf16.msra.mxu0 %v473
        %551 = vmatprep.subr.bf16.mxu0 0
        %552 = vmatpush1.bf16.msra.mxu0 %v474
        %553 = vmatprep.subr.bf16.mxu0 0
        %554 = vmatpush1.bf16.msra.mxu0 %v475
        %555 = vmatprep.subr.bf16.mxu0 0
        %556 = vmatpush1.bf16.msra.mxu0 %v476
        %557 = vmatprep.subr.bf16.mxu0 0
        %558 = vmatpush1.bf16.msra.mxu0 %v477
        %559 = vmatprep.subr.bf16.mxu0 0
        %560 = vmatpush1.bf16.msra.mxu0 0
        %561 = vmatprep.subr.bf16.mxu0 0
        %562 = vmatpush1.bf16.msra.mxu0 0
        %563 = vmatprep.subr.bf16.mxu0 0
        %564 = vmatpush1.bf16.msra.mxu0 0
        %565 = vmatprep.subr.bf16.mxu0 0
        %566 = vmatpush1.bf16.msra.mxu0 0
        %567 = vmatprep.subr.bf16.mxu0 0
        %568 = vmatpush1.bf16.msra.mxu0 0
        %569 = vmatprep.subr.bf16.mxu0 0
        %570 = vmatpush1.bf16.msra.mxu0 0
        %571 = vmatprep.subr.bf16.mxu0 0
        %572 = vmatpush1.bf16.msra.mxu0 0
        %573 = vmatprep.subr.bf16.mxu0 0
        %574 = vmatpush1.bf16.msra.mxu0 0
        %575 = vmatprep.mubr.bf16.mxu0 0
        %576 = vmatmul.mubr.bf16.gmra.mrb[0].mxu0 %v302
        %v577 = vpop.f32.mrb[0].mxu0
        %v578 = vadd.f32 %v537, %v577
        %v579 = vpop.f32.mrb[0].mxu0
        %v580 = vpop.f32.mrb[0].mxu0
        %v581 = vadd.f32 %v540, %v580
        %v582 = vpop.f32.mrb[0].mxu0
        %583 = vdwg.mxu0
        %v584 = vmax.f32 %v578, 0.0
        %v585 = vmax.f32 %v581, 0.0
        %v586 = vpack.c.bf16 %v585, %v584
        %v588 = vshrl.u32 %v586, 16
        %v590 = vrot.slane %v588, 7
        %v591 = vshll.u32 %v586, 16
        %v593 = vor.u32 %v590, %v591
        %v595 = vsel %vm288, 0, %v593
        %v596 = vrot.slane %v591, 1
        %v597 = vor.u32 %v588, %v596
        %v599 = vsel %vm295, %v597, 0
        %600 = vst [vmem:[#allocation2] sm:$0xff] %v595
        %601 = vst [vmem:[#allocation2 + $0x8] sm:$0xff] %v586
        %602 = vst [vmem:[#allocation2 + $0x10] sm:$0xff] %v599
        %v603 = vld [vmem:[#allocation2] sm:$0xff]
        %v604 = vld [vmem:[#allocation2 + $0x8] sm:$0xff]
        %v605 = vld [vmem:[#allocation2 + $0x10] sm:$0xff]
        %v606 = vld [vmem:[#allocation8] sm:$0xf]
        %v607 = vld [vmem:[#allocation8 + $0x4] sm:$0xf]
        %v608 = vld [vmem:[#allocation8 + $0x8] sm:$0xf]
        %v609 = vld [vmem:[#allocation8 + $0xc] sm:$0xf]
        %v610 = vld [vmem:[#allocation8 + $0x10] sm:$0xf]
        %v611 = vld [vmem:[#allocation8 + $0x14] sm:$0xf]
        %v612 = vld [vmem:[#allocation8 + $0x18] sm:$0xf]
        %v613 = vld [vmem:[#allocation8 + $0x1c] sm:$0xf]
        %v614 = vld [vmem:[#allocation8 + $0x20] sm:$0xf]
        %v615 = vld [vmem:[#allocation8 + $0x24] sm:$0xf]
        %v616 = vld [vmem:[#allocation8 + $0x28] sm:$0xf]
        %v617 = vld [vmem:[#allocation8 + $0x2c] sm:$0xf]
        %v618 = vld [vmem:[#allocation8 + $0x30] sm:$0xf]
        %v619 = vld [vmem:[#allocation8 + $0x34] sm:$0xf]
        %v620 = vld [vmem:[#allocation8 + $0x38] sm:$0xf]
        %v621 = vld [vmem:[#allocation8 + $0x3c] sm:$0xf]
        %v622 = vld [vmem:[#allocation8 + $0x40] sm:$0xf]
        %v623 = vld [vmem:[#allocation8 + $0x44] sm:$0xf]
        %v624 = vld [vmem:[#allocation8 + $0x48] sm:$0xf]
        %v625 = vld [vmem:[#allocation8 + $0x4c] sm:$0xf]
        %v626 = vld [vmem:[#allocation8 + $0x50] sm:$0xf]
        %v627 = vld [vmem:[#allocation8 + $0x54] sm:$0xf]
        %v628 = vld [vmem:[#allocation8 + $0x58] sm:$0xf]
        %v629 = vld [vmem:[#allocation8 + $0x5c] sm:$0xf]
        %v630 = vld [vmem:[#allocation8 + $0x60] sm:$0xf]
        %v631 = vld [vmem:[#allocation8 + $0x64] sm:$0xf]
        %v632 = vld [vmem:[#allocation8 + $0x68] sm:$0xf]
        %v633 = vld [vmem:[#allocation8 + $0x6c] sm:$0xf]
        %v634 = vld [vmem:[#allocation8 + $0x70] sm:$0xf]
        %v635 = vld [vmem:[#allocation8 + $0x74] sm:$0xf]
        %v636 = vld [vmem:[#allocation8 + $0x78] sm:$0xf]
        %v637 = vld [vmem:[#allocation8 + $0x7c] sm:$0xf]
        %v638 = vld [vmem:[#allocation8 + $0x80] sm:$0xf]
        %v639 = vld [vmem:[#allocation8 + $0x84] sm:$0xf]
        %v640 = vld [vmem:[#allocation8 + $0x88] sm:$0xf]
        %v641 = vld [vmem:[#allocation8 + $0x8c] sm:$0xf]
        %v642 = vld [vmem:[#allocation8 + $0x90] sm:$0xf]
        %v643 = vld [vmem:[#allocation8 + $0x94] sm:$0xf]
        %v644 = vld [vmem:[#allocation8 + $0x98] sm:$0xf]
        %v645 = vld [vmem:[#allocation8 + $0x9c] sm:$0xf]
        %v646 = vld [vmem:[#allocation8 + $0xa0] sm:$0xf]
        %v647 = vld [vmem:[#allocation8 + $0xa4] sm:$0xf]
        %v648 = vld [vmem:[#allocation8 + $0xa8] sm:$0xf]
        %v649 = vld [vmem:[#allocation8 + $0xac] sm:$0xf]
        %v650 = vld [vmem:[#allocation8 + $0xb0] sm:$0xf]
        %v651 = vld [vmem:[#allocation8 + $0xb4] sm:$0xf]
        %v652 = vld [vmem:[#allocation8 + $0xb8] sm:$0xf]
        %v653 = vld [vmem:[#allocation8 + $0xbc] sm:$0xf]
        %v654 = vld [vmem:[%s4] sm:$0x1]
        %v656 = vlaneseq
        %v657 = vshrl.u32 %v656, 7
        %v658 = vsub.s32 0, %v657
        %v659 = vrot.slane %v654, %v658
        %v709 = vunpack.c.l.b16 %v606
        %v710 = vunpack.c.l.b16 %v607
        %v711 = vunpack.c.l.b16 %v608
        %v712 = vunpack.c.l.b16 %v609
        %v713 = vunpack.c.l.b16 %v610
        %v714 = vunpack.c.l.b16 %v611
        %v715 = vunpack.c.l.b16 %v612
        %v716 = vunpack.c.l.b16 %v613
        %v717 = vunpack.c.l.b16 %v614
        %v718 = vunpack.c.l.b16 %v615
        %v719 = vunpack.c.l.b16 %v616
        %v720 = vunpack.c.l.b16 %v617
        %v721 = vunpack.c.l.b16 %v618
        %v722 = vunpack.c.l.b16 %v619
        %v723 = vunpack.c.l.b16 %v620
        %v724 = vunpack.c.l.b16 %v621
        %v725 = vunpack.c.l.b16 %v622
        %v726 = vunpack.c.l.b16 %v623
        %v727 = vunpack.c.l.b16 %v624
        %v728 = vunpack.c.l.b16 %v625
        %v729 = vunpack.c.l.b16 %v626
        %v730 = vunpack.c.l.b16 %v627
        %v731 = vunpack.c.l.b16 %v628
        %v732 = vunpack.c.l.b16 %v629
        %v733 = vunpack.c.l.b16 %v630
        %v734 = vunpack.c.l.b16 %v631
        %v735 = vunpack.c.l.b16 %v632
        %v736 = vunpack.c.l.b16 %v633
        %v737 = vunpack.c.l.b16 %v634
        %v738 = vunpack.c.l.b16 %v635
        %v739 = vunpack.c.l.b16 %v636
        %v740 = vunpack.c.l.b16 %v637
        %v741 = vunpack.c.l.b16 %v638
        %v742 = vunpack.c.l.b16 %v639
        %v743 = vunpack.c.l.b16 %v640
        %v744 = vunpack.c.l.b16 %v641
        %v745 = vunpack.c.l.b16 %v642
        %v746 = vunpack.c.l.b16 %v643
        %v747 = vunpack.c.l.b16 %v644
        %v748 = vunpack.c.l.b16 %v645
        %v749 = vunpack.c.l.b16 %v646
        %v750 = vunpack.c.l.b16 %v647
        %v751 = vunpack.c.l.b16 %v648
        %v752 = vunpack.c.l.b16 %v649
        %v753 = vunpack.c.l.b16 %v650
        %v754 = vunpack.c.l.b16 %v651
        %v755 = vunpack.c.l.b16 %v652
        %v756 = vunpack.c.l.b16 %v653
        %v757 = vpack.c.b16 %v710, %v709
        %v758 = vpack.c.b16 %v712, %v711
        %v759 = vpack.c.b16 %v714, %v713
        %v760 = vpack.c.b16 %v716, %v715
        %v761 = vpack.c.b16 %v718, %v717
        %v762 = vpack.c.b16 %v720, %v719
        %v763 = vpack.c.b16 %v722, %v721
        %v764 = vpack.c.b16 %v724, %v723
        %v765 = vpack.c.b16 %v726, %v725
        %v766 = vpack.c.b16 %v728, %v727
        %v767 = vpack.c.b16 %v730, %v729
        %v768 = vpack.c.b16 %v732, %v731
        %v769 = vpack.c.b16 %v734, %v733
        %v770 = vpack.c.b16 %v736, %v735
        %v771 = vpack.c.b16 %v738, %v737
        %v772 = vpack.c.b16 %v740, %v739
        %v773 = vpack.c.b16 %v742, %v741
        %v774 = vpack.c.b16 %v744, %v743
        %v775 = vpack.c.b16 %v746, %v745
        %v776 = vpack.c.b16 %v748, %v747
        %v777 = vpack.c.b16 %v750, %v749
        %v778 = vpack.c.b16 %v752, %v751
        %v779 = vpack.c.b16 %v754, %v753
        %v780 = vpack.c.b16 %v756, %v755
        %805 = vmatprep.subr.bf16.mxu0 0
        %806 = vmatpush1.bf16.msra.mxu0 %v757
        %807 = vmatprep.subr.bf16.mxu0 0
        %808 = vmatpush1.bf16.msra.mxu0 %v758
        %809 = vmatprep.subr.bf16.mxu0 0
        %810 = vmatpush1.bf16.msra.mxu0 %v759
        %811 = vmatprep.subr.bf16.mxu0 0
        %812 = vmatpush1.bf16.msra.mxu0 %v760
        %813 = vmatprep.subr.bf16.mxu0 0
        %814 = vmatpush1.bf16.msra.mxu0 %v761
        %815 = vmatprep.subr.bf16.mxu0 0
        %816 = vmatpush1.bf16.msra.mxu0 %v762
        %817 = vmatprep.subr.bf16.mxu0 0
        %818 = vmatpush1.bf16.msra.mxu0 %v763
        %819 = vmatprep.subr.bf16.mxu0 0
        %820 = vmatpush1.bf16.msra.mxu0 %v764
        %821 = vmatprep.subr.bf16.mxu0 0
        %822 = vmatpush1.bf16.msra.mxu0 %v765
        %823 = vmatprep.subr.bf16.mxu0 0
        %824 = vmatpush1.bf16.msra.mxu0 %v766
        %825 = vmatprep.subr.bf16.mxu0 0
        %826 = vmatpush1.bf16.msra.mxu0 %v767
        %827 = vmatprep.subr.bf16.mxu0 0
        %828 = vmatpush1.bf16.msra.mxu0 %v768
        %829 = vmatprep.subr.bf16.mxu0 0
        %830 = vmatpush1.bf16.msra.mxu0 %v769
        %831 = vmatprep.subr.bf16.mxu0 0
        %832 = vmatpush1.bf16.msra.mxu0 %v770
        %833 = vmatprep.subr.bf16.mxu0 0
        %834 = vmatpush1.bf16.msra.mxu0 %v771
        %835 = vmatprep.subr.bf16.mxu0 0
        %836 = vmatpush1.bf16.msra.mxu0 %v772
        %837 = vmatprep.mubr.bf16.mxu0 %v604
        %838 = vmatmul.mubr.bf16.gmra.mrb[0].mxu0 %v603
        %v839 = vpop.f32.mrb[0].mxu0
        %v840 = vadd.f32 %v659, %v839
        %v841 = vpop.f32.mrb[0].mxu0
        %v842 = vpop.f32.mrb[0].mxu0
        %v843 = vadd.f32 %v659, %v842
        %v844 = vpop.f32.mrb[0].mxu0
        %845 = vdwg.mxu0
        %846 = vmatprep.subr.bf16.mxu0 0
        %847 = vmatpush1.bf16.msra.mxu0 %v773
        %848 = vmatprep.subr.bf16.mxu0 0
        %849 = vmatpush1.bf16.msra.mxu0 %v774
        %850 = vmatprep.subr.bf16.mxu0 0
        %851 = vmatpush1.bf16.msra.mxu0 %v775
        %852 = vmatprep.subr.bf16.mxu0 0
        %853 = vmatpush1.bf16.msra.mxu0 %v776
        %854 = vmatprep.subr.bf16.mxu0 0
        %855 = vmatpush1.bf16.msra.mxu0 %v777
        %856 = vmatprep.subr.bf16.mxu0 0
        %857 = vmatpush1.bf16.msra.mxu0 %v778
        %858 = vmatprep.subr.bf16.mxu0 0
        %859 = vmatpush1.bf16.msra.mxu0 %v779
        %860 = vmatprep.subr.bf16.mxu0 0
        %861 = vmatpush1.bf16.msra.mxu0 %v780
        %862 = vmatprep.subr.bf16.mxu0 0
        %863 = vmatpush1.bf16.msra.mxu0 0
        %864 = vmatprep.subr.bf16.mxu0 0
        %865 = vmatpush1.bf16.msra.mxu0 0
        %866 = vmatprep.subr.bf16.mxu0 0
        %867 = vmatpush1.bf16.msra.mxu0 0
        %868 = vmatprep.subr.bf16.mxu0 0
        %869 = vmatpush1.bf16.msra.mxu0 0
        %870 = vmatprep.subr.bf16.mxu0 0
        %871 = vmatpush1.bf16.msra.mxu0 0
        %872 = vmatprep.subr.bf16.mxu0 0
        %873 = vmatpush1.bf16.msra.mxu0 0
        %874 = vmatprep.subr.bf16.mxu0 0
        %875 = vmatpush1.bf16.msra.mxu0 0
        %876 = vmatprep.subr.bf16.mxu0 0
        %877 = vmatpush1.bf16.msra.mxu0 0
        %878 = vmatprep.mubr.bf16.mxu0 0
        %879 = vmatmul.mubr.bf16.gmra.mrb[0].mxu0 %v605
        %v880 = vpop.f32.mrb[0].mxu0
        %v881 = vadd.f32 %v840, %v880
        %v882 = vpop.f32.mrb[0].mxu0
        %v883 = vpop.f32.mrb[0].mxu0
        %v884 = vadd.f32 %v843, %v883
        %v885 = vpop.f32.mrb[0].mxu0
        %886 = vdwg.mxu0
        %v887 = vld [vmem:[%s237] sm:$0xff]
        %v888 = vld [vmem:[%s237 + $0x8] sm:$0xff]
        %v889 = vadd.f32 %v881, %v887
        %v890 = vadd.f32 %v884, %v888
        %v891 = vmax.f32 %v889, 0.0
        %v892 = vmax.f32 %v890, 0.0
        %893 = vst [vmem:[%s271] sm:$0xff] %v891
        %894 = vst [vmem:[%s271 + $0x8] sm:$0xff] %v892
        %s895 = sand.u32 %s141, 1
        %s896 = scalar_lea.sflag [#allocation5], %s895
        %s897 = sand.u32 %s141, 1
        %s898 = smul.addr %s897, 16
        %s899 = scalar_lea.vmem [#allocation9], %s898
        // Predicated region
        $region53: #{tpu_custom_call.1} parent=39 // pred_check
          %p900 = pneg %p151
        $region54: #{tpu_custom_call.1} parent=39 // pred_check_branch
          %902 = sbr.rel (%p900) target = $region56
        $region55: #{tpu_custom_call.1} parent=39 // pred_region
          %s903 = smul.u32 2, %s23
          %s905 = ssub.s32 256, 256
          %906 = vsyncadd %s896, %s905
          %s907 = smul.addr %s903, 128
          %s908 = scalar_lea.hbm %s5, %s907
          %s909 = sshll.u32 %s899, 4
          %s910 = int_to_ptr.vmem [resolvable:$true] %s909
          %915 = dma.vmem_to_hbm [thread:$0]  %s910, 256, %s908, %s896, 128, 128, 8
        $region56: #{tpu_custom_call.1} parent=39 // pred_fallthru
          _
      $region40: #{tpu_custom_call.1} parent=5 // pred_fallthru
        _
      %p916 = scmp.le.s32.totalorder 2, %s18
      // Predicated region
      $region57: #{tpu_custom_call.1} parent=5 // pred_check
        %p917 = pneg %p916
      $region58: #{tpu_custom_call.1} parent=5 // pred_check_branch
        %919 = sbr.rel (%p917) target = $region60
      $region59: #{tpu_custom_call.1} parent=5 // pred_region
        %s920 = ssub.s32 %s18, 2
        // Predicated region
        $region61: #{tpu_custom_call.1} parent=59 // pred_check
          %p921 = pneg %p157
        $region62: #{tpu_custom_call.1} parent=59 // pred_check_branch
          %923 = sbr.rel (%p921) target = $region64
        $region63: #{tpu_custom_call.1} parent=59 // pred_region
          %s924 = sand.u32 %s142, 1
          %s925 = scalar_lea.sflag [#allocation5], %s924
          %s926 = sand.u32 %s142, 1
          %s927 = smul.addr %s926, 16
          %s928 = scalar_lea.vmem [#allocation9], %s927
          %929 = dma.done %s925, 256
        $region64: #{tpu_custom_call.1} parent=59 // pred_fallthru
          _
      $region60: #{tpu_custom_call.1} parent=5 // pred_fallthru
        _
    $region6: #{tpu_custom_call.1} parent=1 // loop_footer
      %s22 = sadd.s32 1, %s18
    $region7: #{tpu_custom_call.1} parent=1 // loop_footer_branch
      %17 = sbr.rel target = $region3
    $region8: #{tpu_custom_call.1} parent=1 // loop_exit
      _
    %930 = vsyncpa [#allocation4], 1
    %s931 = scalar_lea.sflag [#allocation4], 1
    %932 = vsyncpa %s931, 1
    %933 = vsyncpa [#allocation7], 1
    %934 = vsyncpa [#allocation5], 1
    %s935 = scalar_lea.sflag [#allocation5], 1
    %936 = vsyncpa %s935, 1

</llo_original>
